<compile_context>
chip_gen: v7x
topology: tpu7x:2x2x1
jax: 0.10.0
libtpu: 0.0.40
codegen_flags: <defaults>
</compile_context>

<pallas_src>
import jax
import jax.numpy as jnp
from jax.experimental import pallas as pl
from jax.experimental.pallas import tpu as pltpu

# ---------------- model dims (small, consistent with the module) ----------------
B = 2             # batch
CIN = 4           # input channels
H = W = 16        # spatial
COUT = 32         # backbone.out_features
BOT = 64          # bottleneck_dim
NUM_CLASSES = 10
KH = KW = 3
BN_EPS = 1e-5

LANES = 128
K_IM2COL = KH * KW * CIN            # 36
KPAD = 40                           # conv contraction dim, padded to sublane multiple

# ---------------- packed parameter slab layout ([TOTAL_ROWS, 128] f32) -----------
# rows [0:36]                : K-packed conv weights (row = t*CIN+ci, t = kh*KW+kw),
#                              lanes [0:COUT]
# rows [W1_OFF : +COUT]      : fc1_w.T, lanes [F2_OFF : F2_OFF+BOT]   (lane-placed!)
# rows [W2_OFF : +128]       : 128-row head block; fc2_w.T occupies rows
#                              [W2_OFF+F2_OFF : +BOT], lanes [PRED_OFF : +NUM_CLASSES]
# rows VEC_OFF..VEC_OFF+4    : conv_b (lanes 0:COUT), fc1_b / gamma / beta
#                              (lanes F2_OFF:+BOT), fc2_b (lanes PRED_OFF:+NC)
W1_OFF = KPAD                       # 40
W2_OFF = W1_OFF + COUT              # 72
VEC_OFF = W2_OFF + LANES            # 200
TOTAL_ROWS = VEC_OFF + 8            # 208

# ---------------- packed output slab layout ([B, 128] f32) -----------------------
F1_OFF = 0
F2_OFF = COUT                       # 32
PRED_OFF = COUT + BOT               # 96


def _classifier_kernel(col_ref, p_ref, out_ref):
    """col_ref: im2col input [B*H*W, KPAD]; p_ref: packed params [208, 128];
    out_ref: packed outputs [B, 128] (f1 | f2 | pred | zero-pad)."""
    # ---- backbone conv (3x3, pad=1) as ONE K-packed MXU matmul -------------------
    acc = jnp.dot(col_ref[...], p_ref[0:KPAD, 0:COUT],
                  preferred_element_type=jnp.float32)                 # [B*H*W, COUT]
    bc = p_ref[VEC_OFF + 0:VEC_OFF + 1, 0:COUT]                       # [1, COUT]
    conv = jnp.maximum(acc + bc, 0.0)                                 # ReLU

    # ---- global average pool: segment reduce over the H*W sublane axis -----------
    conv3 = conv.reshape(B, H * W, COUT)                              # layout-preserving
    f1 = jnp.sum(conv3, axis=1) * jnp.float32(1.0 / (H * W))          # [B, COUT]

    # ---- bottleneck: Linear + BatchNorm1d (batch stats) + ReLU -------------------
    # fc1 weights/bias/BN vectors are packed at lanes [32:96], so z and f2 land at
    # their output-slab lane positions with zeros elsewhere (gamma=0 outside keeps
    # the folded-BN FMA exactly zero there).
    z = jnp.dot(f1, p_ref[W1_OFF:W1_OFF + COUT, :],
                preferred_element_type=jnp.float32) \
        + p_ref[VEC_OFF + 1:VEC_OFF + 2, :]                           # [B, 128]
    mu = jnp.mean(z, axis=0, keepdims=True)
    var = jnp.mean((z - mu) * (z - mu), axis=0, keepdims=True)        # biased (train mode)
    gamma = p_ref[VEC_OFF + 2:VEC_OFF + 3, :]
    beta = p_ref[VEC_OFF + 3:VEC_OFF + 4, :]
    s = gamma * jax.lax.rsqrt(var + BN_EPS)                           # EUP, free slot
    shift = beta - mu * s
    f2 = jnp.maximum(z * s + shift, 0.0)                              # [B,128], lanes 32:96

    # ---- head: Linear -------------------------------------------------------------
    # fc2 weights occupy rows 32:96 of a 128-row block (matching f2's lane placement)
    # and lanes 96:106, so pred lands at lanes 96:106 with zeros elsewhere.
    pred = jnp.dot(f2, p_ref[W2_OFF:W2_OFF + LANES, :],
                   preferred_element_type=jnp.float32) \
        + p_ref[VEC_OFF + 4:VEC_OFF + 5, :]                           # [B,128], lanes 96:106

    # ---- output: one full-width unmasked store + one small store for f1 ----------
    out_ref[...] = f2 + pred                       # disjoint lanes; lanes 0:32 are zero
    out_ref[:, F1_OFF:F1_OFF + COUT] = f1


def pack_params(params):
    """One-time (init-time) packing of all parameters into kernel layout: [208,128] f32."""
    slab = jnp.zeros((TOTAL_ROWS, LANES), jnp.float32)
    wc = params["conv_w"]                                             # [COUT, CIN, KH, KW]
    # K-packed conv weights: row index = (kh*KW + kw)*CIN + ci, lane = cout.
    wk = jnp.transpose(wc, (2, 3, 1, 0)).reshape(K_IM2COL, COUT)
    slab = slab.at[0:K_IM2COL, 0:COUT].set(wk)
    # fc1.T lane-placed at the f2 output lanes.
    slab = slab.at[W1_OFF:W1_OFF + COUT, F2_OFF:F2_OFF + BOT].set(params["fc1_w"].T)
    # fc2.T: rows offset by F2_OFF inside a 128-row block (to contract against the
    # full-width f2 value), columns at the pred output lanes.
    slab = slab.at[W2_OFF + F2_OFF:W2_OFF + F2_OFF + BOT,
                   PRED_OFF:PRED_OFF + NUM_CLASSES].set(params["fc2_w"].T)
    # Bias / BN vectors at their target lanes.
    slab = slab.at[VEC_OFF + 0, 0:COUT].set(params["conv_b"])
    slab = slab.at[VEC_OFF + 1, F2_OFF:F2_OFF + BOT].set(params["fc1_b"])
    slab = slab.at[VEC_OFF + 2, F2_OFF:F2_OFF + BOT].set(params["bn_gamma"])
    slab = slab.at[VEC_OFF + 3, F2_OFF:F2_OFF + BOT].set(params["bn_beta"])
    slab = slab.at[VEC_OFF + 4, PRED_OFF:PRED_OFF + NUM_CLASSES].set(params["fc2_b"])
    return slab


def image_classifier_forward(x, packed_params):
    """x: [B, CIN, H, W] float32 (NCHW, PyTorch convention). packed_params: [208,128].
    Returns (predictions, f1, f2)."""
    # Wrapper-side im2col (cheap XLA; hidden behind the kernel's input DMA prologue):
    # lane-dense [B*H*W, 36] padded to [B*H*W, 40], K ordered (kh, kw, ci) to match
    # the slab's conv-weight rows.
    xp = jnp.pad(x, ((0, 0), (0, 0), (1, 1), (1, 1)))                 # [B, CIN, H+2, W+2]
    xp = jnp.transpose(xp, (0, 2, 3, 1))                              # [B, H+2, W+2, CIN]
    taps = [xp[:, kh:kh + H, kw:kw + W, :] for kh in range(KH) for kw in range(KW)]
    col = jnp.stack(taps, axis=3)                                     # [B, H, W, 9, CIN]
    col = col.reshape(B * H * W, K_IM2COL)                            # [512, 36]
    col = jnp.pad(col, ((0, 0), (0, KPAD - K_IM2COL)))                # [512, 40]

    flops = (2 * B * H * W * KPAD * COUT                              # conv matmul
             + B * H * W * COUT                                       # pool reduce
             + 2 * B * COUT * LANES                                   # bottleneck linear
             + 2 * B * LANES * LANES)                                 # head linear
    bytes_accessed = (B * H * W * KPAD * 4 + TOTAL_ROWS * LANES * 4 + B * LANES * 4)

    vmem = pl.BlockSpec(memory_space=pltpu.MemorySpace.VMEM)
    out = pl.pallas_call(
        _classifier_kernel,
        out_shape=jax.ShapeDtypeStruct((B, LANES), jnp.float32),
        in_specs=[vmem, vmem],
        out_specs=vmem,
        cost_estimate=pl.CostEstimate(flops=flops, transcendentals=LANES,
                                      bytes_accessed=bytes_accessed),
    )(col, packed_params)

    f1 = out[:, F1_OFF:F1_OFF + COUT]
    f2 = out[:, F2_OFF:F2_OFF + BOT]
    pred = out[:, PRED_OFF:PRED_OFF + NUM_CLASSES]
    return pred, f1, f2


def init_params(key):
    ks = jax.random.split(key, 6)
    scale = 0.05
    return {
        "conv_w": scale * jax.random.normal(ks[0], (COUT, CIN, KH, KW), jnp.float32),
        "conv_b": scale * jax.random.normal(ks[1], (COUT,), jnp.float32),
        "fc1_w": scale * jax.random.normal(ks[2], (BOT, COUT), jnp.float32),
        "fc1_b": scale * jax.random.normal(ks[3], (BOT,), jnp.float32),
        "bn_gamma": jnp.ones((BOT,), jnp.float32),
        "bn_beta": jnp.zeros((BOT,), jnp.float32),
        "fc2_w": scale * jax.random.normal(ks[4], (NUM_CLASSES, BOT), jnp.float32),
        "fc2_b": scale * jax.random.normal(ks[5], (NUM_CLASSES,), jnp.float32),
    }


if __name__ == "__main__":
    key = jax.random.PRNGKey(0)
    kp, kx = jax.random.split(key)
    params = init_params(kp)
    packed = jax.block_until_ready(pack_params(params))               # one-time packing
    x = jax.random.normal(kx, (B, CIN, H, W), jnp.float32)            # NCHW, like PyTorch

    pred, f1, f2 = jax.jit(image_classifier_forward)(x, packed)
    jax.block_until_ready((pred, f1, f2))

    assert pred.shape == (B, NUM_CLASSES)
    assert f1.shape == (B, COUT)
    assert f2.shape == (B, BOT)
    print("KERNEL_OK")
</pallas_src>

<mosaic_0001>
module attributes {stable_mosaic.version = 11 : i64} {
  func.func @_classifier_kernel(%arg0: memref<512x40xf32, #tpu.memory_space<vmem>>, %arg1: memref<208x128xf32, #tpu.memory_space<vmem>>, %arg2: memref<2x128xf32, #tpu.memory_space<vmem>>) attributes {dimension_semantics = [], scalar_prefetch = 0 : i64, scratch_operands = 0 : i64, tpu.core_type = #tpu.core_type<tc>} {
    %c0 = arith.constant 0 : index
    %c0_0 = arith.constant 0 : index
    %0 = vector.load %arg0[%c0, %c0_0] : memref<512x40xf32, #tpu.memory_space<vmem>>, vector<512x40xf32>
    %c0_1 = arith.constant 0 : index
    %c0_2 = arith.constant 0 : index
    %1 = vector.load %arg1[%c0_1, %c0_2] : memref<208x128xf32, #tpu.memory_space<vmem>>, vector<40x32xf32>
    %cst = arith.constant dense<0.000000e+00> : vector<512x32xf32>
    %2 = tpu.matmul %0, %1, %cst {dimension_numbers = #tpu.dot_dimension_numbers<[1], [0], [0], [1], [0, 0, 1, 1], [], []>} : vector<512x40xf32>, vector<40x32xf32>, vector<512x32xf32> -> vector<512x32xf32>
    %c200 = arith.constant 200 : index
    %c0_3 = arith.constant 0 : index
    %3 = vector.load %arg1[%c200, %c0_3] : memref<208x128xf32, #tpu.memory_space<vmem>>, vector<1x32xf32>
    %4 = vector.broadcast %3 : vector<1x32xf32> to vector<512x32xf32>
    %5 = arith.addf %2, %4 : vector<512x32xf32>
    %cst_4 = arith.constant 0.000000e+00 : f32
    %6 = vector.broadcast %cst_4 : f32 to vector<512x32xf32>
    %7 = arith.maximumf %5, %6 : vector<512x32xf32>
    %8 = vector.shape_cast %7 : vector<512x32xf32> to vector<2x256x32xf32>
    %cst_5 = arith.constant dense<0.000000e+00> : vector<2x32xf32>
    %9 = vector.multi_reduction <add>, %8, %cst_5 [1] : vector<2x256x32xf32> to vector<2x32xf32>
    %cst_6 = arith.constant 3.906250e-03 : f32
    %10 = vector.broadcast %cst_6 : f32 to vector<2x32xf32>
    %11 = arith.mulf %9, %10 : vector<2x32xf32>
    %c40 = arith.constant 40 : index
    %c0_7 = arith.constant 0 : index
    %12 = vector.load %arg1[%c40, %c0_7] : memref<208x128xf32, #tpu.memory_space<vmem>>, vector<32x128xf32>
    %cst_8 = arith.constant dense<0.000000e+00> : vector<2x128xf32>
    %13 = tpu.matmul %11, %12, %cst_8 {dimension_numbers = #tpu.dot_dimension_numbers<[1], [0], [0], [1], [0, 0, 1, 1], [], []>} : vector<2x32xf32>, vector<32x128xf32>, vector<2x128xf32> -> vector<2x128xf32>
    %c201 = arith.constant 201 : index
    %c0_9 = arith.constant 0 : index
    %14 = vector.load %arg1[%c201, %c0_9] : memref<208x128xf32, #tpu.memory_space<vmem>>, vector<1x128xf32>
    %15 = vector.broadcast %14 : vector<1x128xf32> to vector<2x128xf32>
    %16 = arith.addf %13, %15 : vector<2x128xf32>
    %cst_10 = arith.constant dense<0.000000e+00> : vector<128xf32>
    %17 = vector.multi_reduction <add>, %16, %cst_10 [0] : vector<2x128xf32> to vector<128xf32>
    %18 = vector.shape_cast %17 : vector<128xf32> to vector<1x128xf32>
    %cst_11 = arith.constant 2.000000e+00 : f32
    %19 = vector.broadcast %cst_11 : f32 to vector<1x128xf32>
    %20 = arith.divf %18, %19 : vector<1x128xf32>
    %21 = vector.broadcast %20 : vector<1x128xf32> to vector<2x128xf32>
    %22 = arith.subf %16, %21 : vector<2x128xf32>
    %23 = vector.broadcast %20 : vector<1x128xf32> to vector<2x128xf32>
    %24 = arith.subf %16, %23 : vector<2x128xf32>
    %25 = arith.mulf %22, %24 : vector<2x128xf32>
    %cst_12 = arith.constant dense<0.000000e+00> : vector<128xf32>
    %26 = vector.multi_reduction <add>, %25, %cst_12 [0] : vector<2x128xf32> to vector<128xf32>
    %27 = vector.shape_cast %26 : vector<128xf32> to vector<1x128xf32>
    %cst_13 = arith.constant 2.000000e+00 : f32
    %28 = vector.broadcast %cst_13 : f32 to vector<1x128xf32>
    %29 = arith.divf %27, %28 : vector<1x128xf32>
    %c202 = arith.constant 202 : index
    %c0_14 = arith.constant 0 : index
    %30 = vector.load %arg1[%c202, %c0_14] : memref<208x128xf32, #tpu.memory_space<vmem>>, vector<1x128xf32>
    %c203 = arith.constant 203 : index
    %c0_15 = arith.constant 0 : index
    %31 = vector.load %arg1[%c203, %c0_15] : memref<208x128xf32, #tpu.memory_space<vmem>>, vector<1x128xf32>
    %cst_16 = arith.constant 9.99999974E-6 : f32
    %32 = vector.broadcast %cst_16 : f32 to vector<1x128xf32>
    %33 = arith.addf %29, %32 : vector<1x128xf32>
    %34 = math.rsqrt %33 : vector<1x128xf32>
    %35 = arith.mulf %30, %34 : vector<1x128xf32>
    %36 = arith.mulf %20, %35 : vector<1x128xf32>
    %37 = arith.subf %31, %36 : vector<1x128xf32>
    %38 = vector.broadcast %35 : vector<1x128xf32> to vector<2x128xf32>
    %39 = arith.mulf %16, %38 : vector<2x128xf32>
    %40 = vector.broadcast %37 : vector<1x128xf32> to vector<2x128xf32>
    %41 = arith.addf %39, %40 : vector<2x128xf32>
    %cst_17 = arith.constant 0.000000e+00 : f32
    %42 = vector.broadcast %cst_17 : f32 to vector<2x128xf32>
    %43 = arith.maximumf %41, %42 : vector<2x128xf32>
    %c72 = arith.constant 72 : index
    %c0_18 = arith.constant 0 : index
    %44 = vector.load %arg1[%c72, %c0_18] : memref<208x128xf32, #tpu.memory_space<vmem>>, vector<128x128xf32>
    %cst_19 = arith.constant dense<0.000000e+00> : vector<2x128xf32>
    %45 = tpu.matmul %43, %44, %cst_19 {dimension_numbers = #tpu.dot_dimension_numbers<[1], [0], [0], [1], [0, 0, 1, 1], [], []>} : vector<2x128xf32>, vector<128x128xf32>, vector<2x128xf32> -> vector<2x128xf32>
    %c204 = arith.constant 204 : index
    %c0_20 = arith.constant 0 : index
    %46 = vector.load %arg1[%c204, %c0_20] : memref<208x128xf32, #tpu.memory_space<vmem>>, vector<1x128xf32>
    %47 = vector.broadcast %46 : vector<1x128xf32> to vector<2x128xf32>
    %48 = arith.addf %45, %47 : vector<2x128xf32>
    %49 = arith.addf %43, %48 : vector<2x128xf32>
    %c0_21 = arith.constant 0 : index
    %c0_22 = arith.constant 0 : index
    %50 = vector.load %arg2[%c0_21, %c0_22] : memref<2x128xf32, #tpu.memory_space<vmem>>, vector<2x128xf32>
    tpu.vector_store %arg2[%c0_21, %c0_22], %49 {strides = array<i32>} : memref<2x128xf32, #tpu.memory_space<vmem>>, vector<2x128xf32>,
    %c0_23 = arith.constant 0 : index
    %c0_24 = arith.constant 0 : index
    %51 = vector.load %arg2[%c0_23, %c0_24] : memref<2x128xf32, #tpu.memory_space<vmem>>, vector<2x32xf32>
    tpu.vector_store %arg2[%c0_23, %c0_24], %11 {strides = array<i32>} : memref<2x128xf32, #tpu.memory_space<vmem>>, vector<2x32xf32>,
    return
  }
}

</mosaic_0001>

<llo_original>
// kernel: image_classifier_forward.1
$region0: #{image_classifier_forward.1}
  #allocation0 [shape = 'u32[]', space=smem, size = 0x4, offset = 0x4, fixed_abs, tag = 'smem constant byte address 0x4 - core index']
  #allocation1 [shape = 'u32[144,128]{1,0:T(1,128)}', space=vmem, size = 0x12000, scoped, tag = 'internal scratch']
  %s0 = inlined_call_operand.vmem [shape: f32[512,40], index: 0, kind: input, shape index: {}]
  %s1 = inlined_call_operand.vmem [shape: f32[208,128], index: 1, kind: input, shape index: {}]
  %s2 = inlined_call_operand.vmem [shape: f32[2,128], index: 2, kind: output, shape index: {}]
  %s3 = sld [smem:[#allocation0]]
  $region18: #{image_classifier_forward.1} parent=0
    _
  %s5 = ssub.s32 1, %s3
  %s6 = scalar_select 0, %s5, %s3
  // Predicated region
  $region2: #{image_classifier_forward.1} parent=0 // pred_check
    _
  $region3: #{image_classifier_forward.1} parent=0 // pred_check_branch
    %8 = sbr.rel (0) target = $region5
  $region4: #{image_classifier_forward.1} parent=0 // pred_region
    _
  $region5: #{image_classifier_forward.1} parent=0 // pred_fallthru
    _
  // Predicated region
  $region6: #{image_classifier_forward.1} parent=0 // pred_check
    _
  $region7: #{image_classifier_forward.1} parent=0 // pred_check_branch
    %10 = sbr.rel (0) target = $region9
  $region8: #{image_classifier_forward.1} parent=0 // pred_region
    _
  $region9: #{image_classifier_forward.1} parent=0 // pred_fallthru
    _
  %v11 = vld [vmem:[%s0] sm:$0xff]
  %v12 = vld [vmem:[%s0 + $0x8] sm:$0xff]
  %v13 = vld [vmem:[%s0 + $0x10] sm:$0xff]
  %v14 = vld [vmem:[%s0 + $0x18] sm:$0xff]
  %v15 = vld [vmem:[%s0 + $0x20] sm:$0xff]
  %v16 = vld [vmem:[%s0 + $0x28] sm:$0xff]
  %v17 = vld [vmem:[%s0 + $0x30] sm:$0xff]
  %v18 = vld [vmem:[%s0 + $0x38] sm:$0xff]
  %v19 = vld [vmem:[%s0 + $0x40] sm:$0xff]
  %v20 = vld [vmem:[%s0 + $0x48] sm:$0xff]
  %v21 = vld [vmem:[%s0 + $0x50] sm:$0xff]
  %v22 = vld [vmem:[%s0 + $0x58] sm:$0xff]
  %v23 = vld [vmem:[%s0 + $0x60] sm:$0xff]
  %v24 = vld [vmem:[%s0 + $0x68] sm:$0xff]
  %v25 = vld [vmem:[%s0 + $0x70] sm:$0xff]
  %v26 = vld [vmem:[%s0 + $0x78] sm:$0xff]
  %v27 = vld [vmem:[%s0 + $0x80] sm:$0xff]
  %v28 = vld [vmem:[%s0 + $0x88] sm:$0xff]
  %v29 = vld [vmem:[%s0 + $0x90] sm:$0xff]
  %v30 = vld [vmem:[%s0 + $0x98] sm:$0xff]
  %v31 = vld [vmem:[%s0 + $0xa0] sm:$0xff]
  %v32 = vld [vmem:[%s0 + $0xa8] sm:$0xff]
  %v33 = vld [vmem:[%s0 + $0xb0] sm:$0xff]
  %v34 = vld [vmem:[%s0 + $0xb8] sm:$0xff]
  %v35 = vld [vmem:[%s0 + $0xc0] sm:$0xff]
  %v36 = vld [vmem:[%s0 + $0xc8] sm:$0xff]
  %v37 = vld [vmem:[%s0 + $0xd0] sm:$0xff]
  %v38 = vld [vmem:[%s0 + $0xd8] sm:$0xff]
  %v39 = vld [vmem:[%s0 + $0xe0] sm:$0xff]
  %v40 = vld [vmem:[%s0 + $0xe8] sm:$0xff]
  %v41 = vld [vmem:[%s0 + $0xf0] sm:$0xff]
  %v42 = vld [vmem:[%s0 + $0xf8] sm:$0xff]
  %v43 = vld [vmem:[%s0 + $0x100] sm:$0xff]
  %v44 = vld [vmem:[%s0 + $0x108] sm:$0xff]
  %v45 = vld [vmem:[%s0 + $0x110] sm:$0xff]
  %v46 = vld [vmem:[%s0 + $0x118] sm:$0xff]
  %v47 = vld [vmem:[%s0 + $0x120] sm:$0xff]
  %v48 = vld [vmem:[%s0 + $0x128] sm:$0xff]
  %v49 = vld [vmem:[%s0 + $0x130] sm:$0xff]
  %v50 = vld [vmem:[%s0 + $0x138] sm:$0xff]
  %v51 = vld [vmem:[%s0 + $0x140] sm:$0xff]
  %v52 = vld [vmem:[%s0 + $0x148] sm:$0xff]
  %v53 = vld [vmem:[%s0 + $0x150] sm:$0xff]
  %v54 = vld [vmem:[%s0 + $0x158] sm:$0xff]
  %v55 = vld [vmem:[%s0 + $0x160] sm:$0xff]
  %v56 = vld [vmem:[%s0 + $0x168] sm:$0xff]
  %v57 = vld [vmem:[%s0 + $0x170] sm:$0xff]
  %v58 = vld [vmem:[%s0 + $0x178] sm:$0xff]
  %v59 = vld [vmem:[%s0 + $0x180] sm:$0xff]
  %v60 = vld [vmem:[%s0 + $0x188] sm:$0xff]
  %v61 = vld [vmem:[%s0 + $0x190] sm:$0xff]
  %v62 = vld [vmem:[%s0 + $0x198] sm:$0xff]
  %v63 = vld [vmem:[%s0 + $0x1a0] sm:$0xff]
  %v64 = vld [vmem:[%s0 + $0x1a8] sm:$0xff]
  %v65 = vld [vmem:[%s0 + $0x1b0] sm:$0xff]
  %v66 = vld [vmem:[%s0 + $0x1b8] sm:$0xff]
  %v67 = vld [vmem:[%s0 + $0x1c0] sm:$0xff]
  %v68 = vld [vmem:[%s0 + $0x1c8] sm:$0xff]
  %v69 = vld [vmem:[%s0 + $0x1d0] sm:$0xff]
  %v70 = vld [vmem:[%s0 + $0x1d8] sm:$0xff]
  %v71 = vld [vmem:[%s0 + $0x1e0] sm:$0xff]
  %v72 = vld [vmem:[%s0 + $0x1e8] sm:$0xff]
  %v73 = vld [vmem:[%s0 + $0x1f0] sm:$0xff]
  %v74 = vld [vmem:[%s0 + $0x1f8] sm:$0xff]
  %v75 = vld [vmem:[%s1] sm:$0xff]
  %v76 = vld [vmem:[%s1 + $0x8] sm:$0xff]
  %v77 = vld [vmem:[%s1 + $0x10] sm:$0xff]
  %v78 = vld [vmem:[%s1 + $0x18] sm:$0xff]
  %v79 = vld [vmem:[%s1 + $0x20] sm:$0xff]
  %v80 = vld [vmem:[%s1 + $0xc8] sm:$0x1]
  %v81 = vlaneseq
  %v82 = vshrl.u32 %v81, 7
  %v83 = vsub.s32 0, %v82
  %v84 = vrot.slane %v80, %v83
  %vm85 = vcmask 326656
  %v87 = vsel %vm85, %v11, 0
  %v90 = vsel %vm85, %v12, 0
  %v93 = vsel %vm85, %v13, 0
  %v96 = vsel %vm85, %v14, 0
  %v99 = vsel %vm85, %v15, 0
  %v102 = vsel %vm85, %v16, 0
  %v105 = vsel %vm85, %v17, 0
  %v108 = vsel %vm85, %v18, 0
  %v111 = vsel %vm85, %v19, 0
  %v114 = vsel %vm85, %v20, 0
  %v117 = vsel %vm85, %v21, 0
  %v120 = vsel %vm85, %v22, 0
  %v123 = vsel %vm85, %v23, 0
  %v126 = vsel %vm85, %v24, 0
  %v129 = vsel %vm85, %v25, 0
  %v132 = vsel %vm85, %v26, 0
  %v135 = vsel %vm85, %v27, 0
  %v138 = vsel %vm85, %v28, 0
  %v141 = vsel %vm85, %v29, 0
  %v144 = vsel %vm85, %v30, 0
  %v147 = vsel %vm85, %v31, 0
  %v150 = vsel %vm85, %v32, 0
  %v153 = vsel %vm85, %v33, 0
  %v156 = vsel %vm85, %v34, 0
  %v159 = vsel %vm85, %v35, 0
  %v162 = vsel %vm85, %v36, 0
  %v165 = vsel %vm85, %v37, 0
  %v168 = vsel %vm85, %v38, 0
  %v171 = vsel %vm85, %v39, 0
  %v174 = vsel %vm85, %v40, 0
  %v177 = vsel %vm85, %v41, 0
  %v180 = vsel %vm85, %v42, 0
  %v183 = vsel %vm85, %v43, 0
  %v186 = vsel %vm85, %v44, 0
  %v189 = vsel %vm85, %v45, 0
  %v192 = vsel %vm85, %v46, 0
  %v195 = vsel %vm85, %v47, 0
  %v198 = vsel %vm85, %v48, 0
  %v201 = vsel %vm85, %v49, 0
  %v204 = vsel %vm85, %v50, 0
  %v207 = vsel %vm85, %v51, 0
  %v210 = vsel %vm85, %v52, 0
  %v213 = vsel %vm85, %v53, 0
  %v216 = vsel %vm85, %v54, 0
  %v219 = vsel %vm85, %v55, 0
  %v222 = vsel %vm85, %v56, 0
  %v225 = vsel %vm85, %v57, 0
  %v228 = vsel %vm85, %v58, 0
  %v231 = vsel %vm85, %v59, 0
  %v234 = vsel %vm85, %v60, 0
  %v237 = vsel %vm85, %v61, 0
  %v240 = vsel %vm85, %v62, 0
  %v243 = vsel %vm85, %v63, 0
  %v246 = vsel %vm85, %v64, 0
  %v249 = vsel %vm85, %v65, 0
  %v252 = vsel %vm85, %v66, 0
  %v255 = vsel %vm85, %v67, 0
  %v258 = vsel %vm85, %v68, 0
  %v261 = vsel %vm85, %v69, 0
  %v264 = vsel %vm85, %v70, 0
  %v267 = vsel %vm85, %v71, 0
  %v270 = vsel %vm85, %v72, 0
  %v273 = vsel %vm85, %v73, 0
  %v276 = vsel %vm85, %v74, 0
  %278 = vmatprep.subr.mxu0 0.0
  %279 = vmatpush1.msra.mxu0 %v75
  %280 = vmatprep.subr.mxu0 0.0
  %281 = vmatpush1.msra.mxu0 %v76
  %282 = vmatprep.subr.mxu0 0.0
  %283 = vmatpush1.msra.mxu0 %v77
  %284 = vmatprep.subr.mxu0 0.0
  %285 = vmatpush1.msra.mxu0 %v78
  %286 = vmatprep.subr.mxu0 0.0
  %287 = vmatpush1.msra.mxu0 %v79
  %288 = vmatprep.subr.mxu0 0.0
  %289 = vmatpush1.msra.mxu0 0.0
  %290 = vmatprep.subr.mxu0 0.0
  %291 = vmatpush1.msra.mxu0 0.0
  %292 = vmatprep.subr.mxu0 0.0
  %293 = vmatpush1.msra.mxu0 0.0
  %294 = vmatprep.subr.mxu0 0.0
  %295 = vmatpush1.msra.mxu0 0.0
  %296 = vmatprep.subr.mxu0 0.0
  %297 = vmatpush1.msra.mxu0 0.0
  %298 = vmatprep.subr.mxu0 0.0
  %299 = vmatpush1.msra.mxu0 0.0
  %300 = vmatprep.subr.mxu0 0.0
  %301 = vmatpush1.msra.mxu0 0.0
  %302 = vmatprep.subr.mxu0 0.0
  %303 = vmatpush1.msra.mxu0 0.0
  %304 = vmatprep.subr.mxu0 0.0
  %305 = vmatpush1.msra.mxu0 0.0
  %306 = vmatprep.subr.mxu0 0.0
  %307 = vmatpush1.msra.mxu0 0.0
  %308 = vmatprep.subr.mxu0 0.0
  %309 = vmatpush1.msra.mxu0 0.0
  %310 = vmatprep.subr.mxu0 0.0
  %311 = vmatpush1.msra.mxu0 0.0
  %312 = vmatprep.subr.mxu0 0.0
  %313 = vmatpush1.msra.mxu0 0.0
  %314 = vmatprep.subr.mxu0 0.0
  %315 = vmatpush1.msra.mxu0 0.0
  %316 = vmatprep.subr.mxu0 0.0
  %317 = vmatpush1.msra.mxu0 0.0
  %318 = vmatprep.subr.mxu0 0.0
  %319 = vmatpush1.msra.mxu0 0.0
  %320 = vmatprep.subr.mxu0 0.0
  %321 = vmatpush1.msra.mxu0 0.0
  %322 = vmatprep.subr.mxu0 0.0
  %323 = vmatpush1.msra.mxu0 0.0
  %324 = vmatprep.subr.mxu0 0.0
  %325 = vmatpush1.msra.mxu0 0.0
  %326 = vmatprep.subr.mxu0 0.0
  %327 = vmatpush1.msra.mxu0 0.0
  %328 = vmatprep.subr.mxu0 0.0
  %329 = vmatpush1.msra.mxu0 0.0
  %330 = vmatprep.subr.mxu0 0.0
  %331 = vmatpush1.msra.mxu0 0.0
  %332 = vmatprep.subr.mxu0 0.0
  %333 = vmatpush1.msra.mxu0 0.0
  %334 = vmatprep.subr.mxu0 0.0
  %335 = vmatpush1.msra.mxu0 0.0
  %336 = vmatprep.subr.mxu0 0.0
  %337 = vmatpush1.msra.mxu0 0.0
  %338 = vmatprep.subr.mxu0 0.0
  %339 = vmatpush1.msra.mxu0 0.0
  %340 = vmatprep.subr.mxu0 0.0
  %341 = vmatpush1.msra.mxu0 0.0
  %342 = vmatprep.mubr.f32.mxu0 0.0
  %343 = vmatmul.mubr.f32.gmra.mrb[0].mxu0 %v87
  %v344 = vpop.f32.mrb[0].mxu0
  %v345 = vadd.f32 %v84, %v344
  %v346 = vpop.f32.mrb[0].mxu0
  %347 = vmatprep.mubr.f32.mxu0 0.0
  %348 = vmatmul.mubr.f32.gmra.mrb[0].mxu0 %v90
  %v349 = vpop.f32.mrb[0].mxu0
  %v350 = vadd.f32 %v84, %v349
  %v351 = vpop.f32.mrb[0].mxu0
  %352 = vmatprep.mubr.f32.mxu0 0.0
  %353 = vmatmul.mubr.f32.gmra.mrb[0].mxu0 %v93
  %v354 = vpop.f32.mrb[0].mxu0
  %v355 = vadd.f32 %v84, %v354
  %v356 = vpop.f32.mrb[0].mxu0
  %357 = vmatprep.mubr.f32.mxu0 0.0
  %358 = vmatmul.mubr.f32.gmra.mrb[0].mxu0 %v96
  %v359 = vpop.f32.mrb[0].mxu0
  %v360 = vadd.f32 %v84, %v359
  %v361 = vpop.f32.mrb[0].mxu0
  %362 = vmatprep.mubr.f32.mxu0 0.0
  %363 = vmatmul.mubr.f32.gmra.mrb[0].mxu0 %v99
  %v364 = vpop.f32.mrb[0].mxu0
  %v365 = vadd.f32 %v84, %v364
  %v366 = vpop.f32.mrb[0].mxu0
  %367 = vmatprep.mubr.f32.mxu0 0.0
  %368 = vmatmul.mubr.f32.gmra.mrb[0].mxu0 %v102
  %v369 = vpop.f32.mrb[0].mxu0
  %v370 = vadd.f32 %v84, %v369
  %v371 = vpop.f32.mrb[0].mxu0
  %372 = vmatprep.mubr.f32.mxu0 0.0
  %373 = vmatmul.mubr.f32.gmra.mrb[0].mxu0 %v105
  %v374 = vpop.f32.mrb[0].mxu0
  %v375 = vadd.f32 %v84, %v374
  %v376 = vpop.f32.mrb[0].mxu0
  %377 = vmatprep.mubr.f32.mxu0 0.0
  %378 = vmatmul.mubr.f32.gmra.mrb[0].mxu0 %v108
  %v379 = vpop.f32.mrb[0].mxu0
  %v380 = vadd.f32 %v84, %v379
  %v381 = vpop.f32.mrb[0].mxu0
  %382 = vmatprep.mubr.f32.mxu0 0.0
  %383 = vmatmul.mubr.f32.gmra.mrb[0].mxu0 %v111
  %v384 = vpop.f32.mrb[0].mxu0
  %v385 = vadd.f32 %v84, %v384
  %v386 = vpop.f32.mrb[0].mxu0
  %387 = vmatprep.mubr.f32.mxu0 0.0
  %388 = vmatmul.mubr.f32.gmra.mrb[0].mxu0 %v114
  %v389 = vpop.f32.mrb[0].mxu0
  %v390 = vadd.f32 %v84, %v389
  %v391 = vpop.f32.mrb[0].mxu0
  %392 = vmatprep.mubr.f32.mxu0 0.0
  %393 = vmatmul.mubr.f32.gmra.mrb[0].mxu0 %v117
  %v394 = vpop.f32.mrb[0].mxu0
  %v395 = vadd.f32 %v84, %v394
  %v396 = vpop.f32.mrb[0].mxu0
  %397 = vmatprep.mubr.f32.mxu0 0.0
  %398 = vmatmul.mubr.f32.gmra.mrb[0].mxu0 %v120
  %v399 = vpop.f32.mrb[0].mxu0
  %v400 = vadd.f32 %v84, %v399
  %v401 = vpop.f32.mrb[0].mxu0
  %402 = vmatprep.mubr.f32.mxu0 0.0
  %403 = vmatmul.mubr.f32.gmra.mrb[0].mxu0 %v123
  %v404 = vpop.f32.mrb[0].mxu0
  %v405 = vadd.f32 %v84, %v404
  %v406 = vpop.f32.mrb[0].mxu0
  %407 = vmatprep.mubr.f32.mxu0 0.0
  %408 = vmatmul.mubr.f32.gmra.mrb[0].mxu0 %v126
  %v409 = vpop.f32.mrb[0].mxu0
  %v410 = vadd.f32 %v84, %v409
  %v411 = vpop.f32.mrb[0].mxu0
  %412 = vmatprep.mubr.f32.mxu0 0.0
  %413 = vmatmul.mubr.f32.gmra.mrb[0].mxu0 %v129
  %v414 = vpop.f32.mrb[0].mxu0
  %v415 = vadd.f32 %v84, %v414
  %v416 = vpop.f32.mrb[0].mxu0
  %417 = vmatprep.mubr.f32.mxu0 0.0
  %418 = vmatmul.mubr.f32.gmra.mrb[0].mxu0 %v132
  %v419 = vpop.f32.mrb[0].mxu0
  %v420 = vadd.f32 %v84, %v419
  %v421 = vpop.f32.mrb[0].mxu0
  %422 = vmatprep.mubr.f32.mxu0 0.0
  %423 = vmatmul.mubr.f32.gmra.mrb[0].mxu0 %v135
  %v424 = vpop.f32.mrb[0].mxu0
  %v425 = vadd.f32 %v84, %v424
  %v426 = vpop.f32.mrb[0].mxu0
  %427 = vmatprep.mubr.f32.mxu0 0.0
  %428 = vmatmul.mubr.f32.gmra.mrb[0].mxu0 %v138
  %v429 = vpop.f32.mrb[0].mxu0
  %v430 = vadd.f32 %v84, %v429
  %v431 = vpop.f32.mrb[0].mxu0
  %432 = vmatprep.mubr.f32.mxu0 0.0
  %433 = vmatmul.mubr.f32.gmra.mrb[0].mxu0 %v141
  %v434 = vpop.f32.mrb[0].mxu0
  %v435 = vadd.f32 %v84, %v434
  %v436 = vpop.f32.mrb[0].mxu0
  %437 = vmatprep.mubr.f32.mxu0 0.0
  %438 = vmatmul.mubr.f32.gmra.mrb[0].mxu0 %v144
  %v439 = vpop.f32.mrb[0].mxu0
  %v440 = vadd.f32 %v84, %v439
  %v441 = vpop.f32.mrb[0].mxu0
  %442 = vmatprep.mubr.f32.mxu0 0.0
  %443 = vmatmul.mubr.f32.gmra.mrb[0].mxu0 %v147
  %v444 = vpop.f32.mrb[0].mxu0
  %v445 = vadd.f32 %v84, %v444
  %v446 = vpop.f32.mrb[0].mxu0
  %447 = vmatprep.mubr.f32.mxu0 0.0
  %448 = vmatmul.mubr.f32.gmra.mrb[0].mxu0 %v150
  %v449 = vpop.f32.mrb[0].mxu0
  %v450 = vadd.f32 %v84, %v449
  %v451 = vpop.f32.mrb[0].mxu0
  %452 = vmatprep.mubr.f32.mxu0 0.0
  %453 = vmatmul.mubr.f32.gmra.mrb[0].mxu0 %v153
  %v454 = vpop.f32.mrb[0].mxu0
  %v455 = vadd.f32 %v84, %v454
  %v456 = vpop.f32.mrb[0].mxu0
  %457 = vmatprep.mubr.f32.mxu0 0.0
  %458 = vmatmul.mubr.f32.gmra.mrb[0].mxu0 %v156
  %v459 = vpop.f32.mrb[0].mxu0
  %v460 = vadd.f32 %v84, %v459
  %v461 = vpop.f32.mrb[0].mxu0
  %462 = vmatprep.mubr.f32.mxu0 0.0
  %463 = vmatmul.mubr.f32.gmra.mrb[0].mxu0 %v159
  %v464 = vpop.f32.mrb[0].mxu0
  %v465 = vadd.f32 %v84, %v464
  %v466 = vpop.f32.mrb[0].mxu0
  %467 = vmatprep.mubr.f32.mxu0 0.0
  %468 = vmatmul.mubr.f32.gmra.mrb[0].mxu0 %v162
  %v469 = vpop.f32.mrb[0].mxu0
  %v470 = vadd.f32 %v84, %v469
  %v471 = vpop.f32.mrb[0].mxu0
  %472 = vmatprep.mubr.f32.mxu0 0.0
  %473 = vmatmul.mubr.f32.gmra.mrb[0].mxu0 %v165
  %v474 = vpop.f32.mrb[0].mxu0
  %v475 = vadd.f32 %v84, %v474
  %v476 = vpop.f32.mrb[0].mxu0
  %477 = vmatprep.mubr.f32.mxu0 0.0
  %478 = vmatmul.mubr.f32.gmra.mrb[0].mxu0 %v168
  %v479 = vpop.f32.mrb[0].mxu0
  %v480 = vadd.f32 %v84, %v479
  %v481 = vpop.f32.mrb[0].mxu0
  %482 = vmatprep.mubr.f32.mxu0 0.0
  %483 = vmatmul.mubr.f32.gmra.mrb[0].mxu0 %v171
  %v484 = vpop.f32.mrb[0].mxu0
  %v485 = vadd.f32 %v84, %v484
  %v486 = vpop.f32.mrb[0].mxu0
  %487 = vmatprep.mubr.f32.mxu0 0.0
  %488 = vmatmul.mubr.f32.gmra.mrb[0].mxu0 %v174
  %v489 = vpop.f32.mrb[0].mxu0
  %v490 = vadd.f32 %v84, %v489
  %v491 = vpop.f32.mrb[0].mxu0
  %492 = vmatprep.mubr.f32.mxu0 0.0
  %493 = vmatmul.mubr.f32.gmra.mrb[0].mxu0 %v177
  %v494 = vpop.f32.mrb[0].mxu0
  %v495 = vadd.f32 %v84, %v494
  %v496 = vpop.f32.mrb[0].mxu0
  %497 = vmatprep.mubr.f32.mxu0 0.0
  %498 = vmatmul.mubr.f32.gmra.mrb[0].mxu0 %v180
  %v499 = vpop.f32.mrb[0].mxu0
  %v500 = vadd.f32 %v84, %v499
  %v501 = vpop.f32.mrb[0].mxu0
  %502 = vmatprep.mubr.f32.mxu0 0.0
  %503 = vmatmul.mubr.f32.gmra.mrb[0].mxu0 %v183
  %v504 = vpop.f32.mrb[0].mxu0
  %v505 = vadd.f32 %v84, %v504
  %v506 = vpop.f32.mrb[0].mxu0
  %507 = vmatprep.mubr.f32.mxu0 0.0
  %508 = vmatmul.mubr.f32.gmra.mrb[0].mxu0 %v186
  %v509 = vpop.f32.mrb[0].mxu0
  %v510 = vadd.f32 %v84, %v509
  %v511 = vpop.f32.mrb[0].mxu0
  %512 = vmatprep.mubr.f32.mxu0 0.0
  %513 = vmatmul.mubr.f32.gmra.mrb[0].mxu0 %v189
  %v514 = vpop.f32.mrb[0].mxu0
  %v515 = vadd.f32 %v84, %v514
  %v516 = vpop.f32.mrb[0].mxu0
  %517 = vmatprep.mubr.f32.mxu0 0.0
  %518 = vmatmul.mubr.f32.gmra.mrb[0].mxu0 %v192
  %v519 = vpop.f32.mrb[0].mxu0
  %v520 = vadd.f32 %v84, %v519
  %v521 = vpop.f32.mrb[0].mxu0
  %522 = vmatprep.mubr.f32.mxu0 0.0
  %523 = vmatmul.mubr.f32.gmra.mrb[0].mxu0 %v195
  %v524 = vpop.f32.mrb[0].mxu0
  %v525 = vadd.f32 %v84, %v524
  %v526 = vpop.f32.mrb[0].mxu0
  %527 = vmatprep.mubr.f32.mxu0 0.0
  %528 = vmatmul.mubr.f32.gmra.mrb[0].mxu0 %v198
  %v529 = vpop.f32.mrb[0].mxu0
  %v530 = vadd.f32 %v84, %v529
  %v531 = vpop.f32.mrb[0].mxu0
  %532 = vmatprep.mubr.f32.mxu0 0.0
  %533 = vmatmul.mubr.f32.gmra.mrb[0].mxu0 %v201
  %v534 = vpop.f32.mrb[0].mxu0
  %v535 = vadd.f32 %v84, %v534
  %v536 = vpop.f32.mrb[0].mxu0
  %537 = vmatprep.mubr.f32.mxu0 0.0
  %538 = vmatmul.mubr.f32.gmra.mrb[0].mxu0 %v204
  %v539 = vpop.f32.mrb[0].mxu0
  %v540 = vadd.f32 %v84, %v539
  %v541 = vpop.f32.mrb[0].mxu0
  %542 = vmatprep.mubr.f32.mxu0 0.0
  %543 = vmatmul.mubr.f32.gmra.mrb[0].mxu0 %v207
  %v544 = vpop.f32.mrb[0].mxu0
  %v545 = vadd.f32 %v84, %v544
  %v546 = vpop.f32.mrb[0].mxu0
  %547 = vmatprep.mubr.f32.mxu0 0.0
  %548 = vmatmul.mubr.f32.gmra.mrb[0].mxu0 %v210
  %v549 = vpop.f32.mrb[0].mxu0
  %v550 = vadd.f32 %v84, %v549
  %v551 = vpop.f32.mrb[0].mxu0
  %552 = vmatprep.mubr.f32.mxu0 0.0
  %553 = vmatmul.mubr.f32.gmra.mrb[0].mxu0 %v213
  %v554 = vpop.f32.mrb[0].mxu0
  %v555 = vadd.f32 %v84, %v554
  %v556 = vpop.f32.mrb[0].mxu0
  %557 = vmatprep.mubr.f32.mxu0 0.0
  %558 = vmatmul.mubr.f32.gmra.mrb[0].mxu0 %v216
  %v559 = vpop.f32.mrb[0].mxu0
  %v560 = vadd.f32 %v84, %v559
  %v561 = vpop.f32.mrb[0].mxu0
  %562 = vmatprep.mubr.f32.mxu0 0.0
  %563 = vmatmul.mubr.f32.gmra.mrb[0].mxu0 %v219
  %v564 = vpop.f32.mrb[0].mxu0
  %v565 = vadd.f32 %v84, %v564
  %v566 = vpop.f32.mrb[0].mxu0
  %567 = vmatprep.mubr.f32.mxu0 0.0
  %568 = vmatmul.mubr.f32.gmra.mrb[0].mxu0 %v222
  %v569 = vpop.f32.mrb[0].mxu0
  %v570 = vadd.f32 %v84, %v569
  %v571 = vpop.f32.mrb[0].mxu0
  %572 = vmatprep.mubr.f32.mxu0 0.0
  %573 = vmatmul.mubr.f32.gmra.mrb[0].mxu0 %v225
  %v574 = vpop.f32.mrb[0].mxu0
  %v575 = vadd.f32 %v84, %v574
  %v576 = vpop.f32.mrb[0].mxu0
  %577 = vmatprep.mubr.f32.mxu0 0.0
  %578 = vmatmul.mubr.f32.gmra.mrb[0].mxu0 %v228
  %v579 = vpop.f32.mrb[0].mxu0
  %v580 = vadd.f32 %v84, %v579
  %v581 = vpop.f32.mrb[0].mxu0
  %582 = vmatprep.mubr.f32.mxu0 0.0
  %583 = vmatmul.mubr.f32.gmra.mrb[0].mxu0 %v231
  %v584 = vpop.f32.mrb[0].mxu0
  %v585 = vadd.f32 %v84, %v584
  %v586 = vpop.f32.mrb[0].mxu0
  %587 = vmatprep.mubr.f32.mxu0 0.0
  %588 = vmatmul.mubr.f32.gmra.mrb[0].mxu0 %v234
  %v589 = vpop.f32.mrb[0].mxu0
  %v590 = vadd.f32 %v84, %v589
  %v591 = vpop.f32.mrb[0].mxu0
  %592 = vmatprep.mubr.f32.mxu0 0.0
  %593 = vmatmul.mubr.f32.gmra.mrb[0].mxu0 %v237
  %v594 = vpop.f32.mrb[0].mxu0
  %v595 = vadd.f32 %v84, %v594
  %v596 = vpop.f32.mrb[0].mxu0
  %597 = vmatprep.mubr.f32.mxu0 0.0
  %598 = vmatmul.mubr.f32.gmra.mrb[0].mxu0 %v240
  %v599 = vpop.f32.mrb[0].mxu0
  %v600 = vadd.f32 %v84, %v599
  %v601 = vpop.f32.mrb[0].mxu0
  %602 = vmatprep.mubr.f32.mxu0 0.0
  %603 = vmatmul.mubr.f32.gmra.mrb[0].mxu0 %v243
  %v604 = vpop.f32.mrb[0].mxu0
  %v605 = vadd.f32 %v84, %v604
  %v606 = vpop.f32.mrb[0].mxu0
  %607 = vmatprep.mubr.f32.mxu0 0.0
  %608 = vmatmul.mubr.f32.gmra.mrb[0].mxu0 %v246
  %v609 = vpop.f32.mrb[0].mxu0
  %v610 = vadd.f32 %v84, %v609
  %v611 = vpop.f32.mrb[0].mxu0
  %612 = vmatprep.mubr.f32.mxu0 0.0
  %613 = vmatmul.mubr.f32.gmra.mrb[0].mxu0 %v249
  %v614 = vpop.f32.mrb[0].mxu0
  %v615 = vadd.f32 %v84, %v614
  %v616 = vpop.f32.mrb[0].mxu0
  %617 = vmatprep.mubr.f32.mxu0 0.0
  %618 = vmatmul.mubr.f32.gmra.mrb[0].mxu0 %v252
  %v619 = vpop.f32.mrb[0].mxu0
  %v620 = vadd.f32 %v84, %v619
  %v621 = vpop.f32.mrb[0].mxu0
  %622 = vmatprep.mubr.f32.mxu0 0.0
  %623 = vmatmul.mubr.f32.gmra.mrb[0].mxu0 %v255
  %v624 = vpop.f32.mrb[0].mxu0
  %v625 = vadd.f32 %v84, %v624
  %v626 = vpop.f32.mrb[0].mxu0
  %627 = vmatprep.mubr.f32.mxu0 0.0
  %628 = vmatmul.mubr.f32.gmra.mrb[0].mxu0 %v258
  %v629 = vpop.f32.mrb[0].mxu0
  %v630 = vadd.f32 %v84, %v629
  %v631 = vpop.f32.mrb[0].mxu0
  %632 = vmatprep.mubr.f32.mxu0 0.0
  %633 = vmatmul.mubr.f32.gmra.mrb[0].mxu0 %v261
  %v634 = vpop.f32.mrb[0].mxu0
  %v635 = vadd.f32 %v84, %v634
  %v636 = vpop.f32.mrb[0].mxu0
  %637 = vmatprep.mubr.f32.mxu0 0.0
  %638 = vmatmul.mubr.f32.gmra.mrb[0].mxu0 %v264
  %v639 = vpop.f32.mrb[0].mxu0
  %v640 = vadd.f32 %v84, %v639
  %v641 = vpop.f32.mrb[0].mxu0
  %642 = vmatprep.mubr.f32.mxu0 0.0
  %643 = vmatmul.mubr.f32.gmra.mrb[0].mxu0 %v267
  %v644 = vpop.f32.mrb[0].mxu0
  %v645 = vadd.f32 %v84, %v644
  %v646 = vpop.f32.mrb[0].mxu0
  %647 = vmatprep.mubr.f32.mxu0 0.0
  %648 = vmatmul.mubr.f32.gmra.mrb[0].mxu0 %v270
  %v649 = vpop.f32.mrb[0].mxu0
  %v650 = vadd.f32 %v84, %v649
  %v651 = vpop.f32.mrb[0].mxu0
  %652 = vmatprep.mubr.f32.mxu0 0.0
  %653 = vmatmul.mubr.f32.gmra.mrb[0].mxu0 %v273
  %v654 = vpop.f32.mrb[0].mxu0
  %v655 = vadd.f32 %v84, %v654
  %v656 = vpop.f32.mrb[0].mxu0
  %657 = vmatprep.mubr.f32.mxu0 0.0
  %658 = vmatmul.mubr.f32.gmra.mrb[0].mxu0 %v276
  %v659 = vpop.f32.mrb[0].mxu0
  %v660 = vadd.f32 %v84, %v659
  %v661 = vpop.f32.mrb[0].mxu0
  %662 = vdwg.mxu0
  %v663 = vmax.f32 %v345, 0.0
  %v664 = vmax.f32 %v350, 0.0
  %v665 = vmax.f32 %v355, 0.0
  %v666 = vmax.f32 %v360, 0.0
  %v667 = vmax.f32 %v365, 0.0
  %v668 = vmax.f32 %v370, 0.0
  %v669 = vmax.f32 %v375, 0.0
  %v670 = vmax.f32 %v380, 0.0
  %v671 = vmax.f32 %v385, 0.0
  %v672 = vmax.f32 %v390, 0.0
  %v673 = vmax.f32 %v395, 0.0
  %v674 = vmax.f32 %v400, 0.0
  %v675 = vmax.f32 %v405, 0.0
  %v676 = vmax.f32 %v410, 0.0
  %v677 = vmax.f32 %v415, 0.0
  %v678 = vmax.f32 %v420, 0.0
  %v679 = vmax.f32 %v425, 0.0
  %v680 = vmax.f32 %v430, 0.0
  %v681 = vmax.f32 %v435, 0.0
  %v682 = vmax.f32 %v440, 0.0
  %v683 = vmax.f32 %v445, 0.0
  %v684 = vmax.f32 %v450, 0.0
  %v685 = vmax.f32 %v455, 0.0
  %v686 = vmax.f32 %v460, 0.0
  %v687 = vmax.f32 %v465, 0.0
  %v688 = vmax.f32 %v470, 0.0
  %v689 = vmax.f32 %v475, 0.0
  %v690 = vmax.f32 %v480, 0.0
  %v691 = vmax.f32 %v485, 0.0
  %v692 = vmax.f32 %v490, 0.0
  %v693 = vmax.f32 %v495, 0.0
  %v694 = vmax.f32 %v500, 0.0
  %v695 = vmax.f32 %v505, 0.0
  %v696 = vmax.f32 %v510, 0.0
  %v697 = vmax.f32 %v515, 0.0
  %v698 = vmax.f32 %v520, 0.0
  %v699 = vmax.f32 %v525, 0.0
  %v700 = vmax.f32 %v530, 0.0
  %v701 = vmax.f32 %v535, 0.0
  %v702 = vmax.f32 %v540, 0.0
  %v703 = vmax.f32 %v545, 0.0
  %v704 = vmax.f32 %v550, 0.0
  %v705 = vmax.f32 %v555, 0.0
  %v706 = vmax.f32 %v560, 0.0
  %v707 = vmax.f32 %v565, 0.0
  %v708 = vmax.f32 %v570, 0.0
  %v709 = vmax.f32 %v575, 0.0
  %v710 = vmax.f32 %v580, 0.0
  %v711 = vmax.f32 %v585, 0.0
  %v712 = vmax.f32 %v590, 0.0
  %v713 = vmax.f32 %v595, 0.0
  %v714 = vmax.f32 %v600, 0.0
  %v715 = vmax.f32 %v605, 0.0
  %v716 = vmax.f32 %v610, 0.0
  %v717 = vmax.f32 %v615, 0.0
  %v718 = vmax.f32 %v620, 0.0
  %v719 = vmax.f32 %v625, 0.0
  %v720 = vmax.f32 %v630, 0.0
  %v721 = vmax.f32 %v635, 0.0
  %v722 = vmax.f32 %v640, 0.0
  %v723 = vmax.f32 %v645, 0.0
  %v724 = vmax.f32 %v650, 0.0
  %v725 = vmax.f32 %v655, 0.0
  %v726 = vmax.f32 %v660, 0.0
  %vm727 = vcmask 261120
  %v728 = vsel %vm727, %v663, 0.0
  %v729 = vsel %vm727, %v664, 0.0
  %v730 = vadd.f32 %v728, %v729
  %v731 = vsel %vm727, %v665, 0.0
  %v732 = vadd.f32 %v730, %v731
  %v733 = vsel %vm727, %v666, 0.0
  %v734 = vadd.f32 %v732, %v733
  %v735 = vsel %vm727, %v667, 0.0
  %v736 = vadd.f32 %v734, %v735
  %v737 = vsel %vm727, %v668, 0.0
  %v738 = vadd.f32 %v736, %v737
  %v739 = vsel %vm727, %v669, 0.0
  %v740 = vadd.f32 %v738, %v739
  %v741 = vsel %vm727, %v670, 0.0
  %v742 = vadd.f32 %v740, %v741
  %v743 = vsel %vm727, %v671, 0.0
  %v744 = vadd.f32 %v742, %v743
  %v745 = vsel %vm727, %v672, 0.0
  %v746 = vadd.f32 %v744, %v745
  %v747 = vsel %vm727, %v673, 0.0
  %v748 = vadd.f32 %v746, %v747
  %v749 = vsel %vm727, %v674, 0.0
  %v750 = vadd.f32 %v748, %v749
  %v751 = vsel %vm727, %v675, 0.0
  %v752 = vadd.f32 %v750, %v751
  %v753 = vsel %vm727, %v676, 0.0
  %v754 = vadd.f32 %v752, %v753
  %v755 = vsel %vm727, %v677, 0.0
  %v756 = vadd.f32 %v754, %v755
  %v757 = vsel %vm727, %v678, 0.0
  %v758 = vadd.f32 %v756, %v757
  %v759 = vsel %vm727, %v679, 0.0
  %v760 = vadd.f32 %v758, %v759
  %v761 = vsel %vm727, %v680, 0.0
  %v762 = vadd.f32 %v760, %v761
  %v763 = vsel %vm727, %v681, 0.0
  %v764 = vadd.f32 %v762, %v763
  %v765 = vsel %vm727, %v682, 0.0
  %v766 = vadd.f32 %v764, %v765
  %v767 = vsel %vm727, %v683, 0.0
  %v768 = vadd.f32 %v766, %v767
  %v769 = vsel %vm727, %v684, 0.0
  %v770 = vadd.f32 %v768, %v769
  %v771 = vsel %vm727, %v685, 0.0
  %v772 = vadd.f32 %v770, %v771
  %v773 = vsel %vm727, %v686, 0.0
  %v774 = vadd.f32 %v772, %v773
  %v775 = vsel %vm727, %v687, 0.0
  %v776 = vadd.f32 %v774, %v775
  %v777 = vsel %vm727, %v688, 0.0
  %v778 = vadd.f32 %v776, %v777
  %v779 = vsel %vm727, %v689, 0.0
  %v780 = vadd.f32 %v778, %v779
  %v781 = vsel %vm727, %v690, 0.0
  %v782 = vadd.f32 %v780, %v781
  %v783 = vsel %vm727, %v691, 0.0
  %v784 = vadd.f32 %v782, %v783
  %v785 = vsel %vm727, %v692, 0.0
  %v786 = vadd.f32 %v784, %v785
  %v787 = vsel %vm727, %v693, 0.0
  %v788 = vadd.f32 %v786, %v787
  %v789 = vsel %vm727, %v694, 0.0
  %v790 = vadd.f32 %v788, %v789
  %v791 = vrot.slane %v790, 4
  %v792 = vadd.f32 %v790, %v791
  %v793 = vrot.slane %v792, 2
  %v794 = vadd.f32 %v792, %v793
  %v795 = vrot.slane %v794, 1
  %v796 = vadd.f32 %v794, %v795
  %v797 = vsel %vm727, %v695, 0.0
  %v798 = vsel %vm727, %v696, 0.0
  %v799 = vadd.f32 %v797, %v798
  %v800 = vsel %vm727, %v697, 0.0
  %v801 = vadd.f32 %v799, %v800
  %v802 = vsel %vm727, %v698, 0.0
  %v803 = vadd.f32 %v801, %v802
  %v804 = vsel %vm727, %v699, 0.0
  %v805 = vadd.f32 %v803, %v804
  %v806 = vsel %vm727, %v700, 0.0
  %v807 = vadd.f32 %v805, %v806
  %v808 = vsel %vm727, %v701, 0.0
  %v809 = vadd.f32 %v807, %v808
  %v810 = vsel %vm727, %v702, 0.0
  %v811 = vadd.f32 %v809, %v810
  %v812 = vsel %vm727, %v703, 0.0
  %v813 = vadd.f32 %v811, %v812
  %v814 = vsel %vm727, %v704, 0.0
  %v815 = vadd.f32 %v813, %v814
  %v816 = vsel %vm727, %v705, 0.0
  %v817 = vadd.f32 %v815, %v816
  %v818 = vsel %vm727, %v706, 0.0
  %v819 = vadd.f32 %v817, %v818
  %v820 = vsel %vm727, %v707, 0.0
  %v821 = vadd.f32 %v819, %v820
  %v822 = vsel %vm727, %v708, 0.0
  %v823 = vadd.f32 %v821, %v822
  %v824 = vsel %vm727, %v709, 0.0
  %v825 = vadd.f32 %v823, %v824
  %v826 = vsel %vm727, %v710, 0.0
  %v827 = vadd.f32 %v825, %v826
  %v828 = vsel %vm727, %v711, 0.0
  %v829 = vadd.f32 %v827, %v828
  %v830 = vsel %vm727, %v712, 0.0
  %v831 = vadd.f32 %v829, %v830
  %v832 = vsel %vm727, %v713, 0.0
  %v833 = vadd.f32 %v831, %v832
  %v834 = vsel %vm727, %v714, 0.0
  %v835 = vadd.f32 %v833, %v834
  %v836 = vsel %vm727, %v715, 0.0
  %v837 = vadd.f32 %v835, %v836
  %v838 = vsel %vm727, %v716, 0.0
  %v839 = vadd.f32 %v837, %v838
  %v840 = vsel %vm727, %v717, 0.0
  %v841 = vadd.f32 %v839, %v840
  %v842 = vsel %vm727, %v718, 0.0
  %v843 = vadd.f32 %v841, %v842
  %v844 = vsel %vm727, %v719, 0.0
  %v845 = vadd.f32 %v843, %v844
  %v846 = vsel %vm727, %v720, 0.0
  %v847 = vadd.f32 %v845, %v846
  %v848 = vsel %vm727, %v721, 0.0
  %v849 = vadd.f32 %v847, %v848
  %v850 = vsel %vm727, %v722, 0.0
  %v851 = vadd.f32 %v849, %v850
  %v852 = vsel %vm727, %v723, 0.0
  %v853 = vadd.f32 %v851, %v852
  %v854 = vsel %vm727, %v724, 0.0
  %v855 = vadd.f32 %v853, %v854
  %v856 = vsel %vm727, %v725, 0.0
  %v857 = vadd.f32 %v855, %v856
  %v858 = vsel %vm727, %v726, 0.0
  %v859 = vadd.f32 %v857, %v858
  %v860 = vrot.slane %v859, 4
  %v861 = vadd.f32 %v859, %v860
  %v862 = vrot.slane %v861, 2
  %v863 = vadd.f32 %v861, %v862
  %v864 = vrot.slane %v863, 1
  %v865 = vadd.f32 %v863, %v864
  %v866 = vmul.f32 %v796, 0.00390625
  %v867 = vmul.f32 %v865, 0.00390625
  %v868 = vld [vmem:[%s1 + $0x28] sm:$0xff]
  %v869 = vld [vmem:[%s1 + $0x30] sm:$0xff]
  %v870 = vld [vmem:[%s1 + $0x38] sm:$0xff]
  %v871 = vld [vmem:[%s1 + $0x40] sm:$0xff]
  %v872 = vld [vmem:[%s1 + $0xc9] sm:$0x1]
  %v873 = vlaneseq
  %v874 = vshrl.u32 %v873, 7
  %v875 = vsub.s32 0, %v874
  %v876 = vrot.slane %v872, %v875
  %vm879 = vcmask 1041409
  %v880 = vsel %vm879, %v867, %v866
  %v881 = vsel %vm727, %v880, 0
  %883 = vmatprep.subr.mxu0 0.0
  %884 = vmatpush1.msra.mxu0 %v868
  %885 = vmatprep.subr.mxu0 0.0
  %886 = vmatpush1.msra.mxu0 %v869
  %887 = vmatprep.subr.mxu0 0.0
  %888 = vmatpush1.msra.mxu0 %v870
  %889 = vmatprep.subr.mxu0 0.0
  %890 = vmatpush1.msra.mxu0 %v871
  %891 = vmatprep.subr.mxu0 0.0
  %892 = vmatpush1.msra.mxu0 0.0
  %893 = vmatprep.subr.mxu0 0.0
  %894 = vmatpush1.msra.mxu0 0.0
  %895 = vmatprep.subr.mxu0 0.0
  %896 = vmatpush1.msra.mxu0 0.0
  %897 = vmatprep.subr.mxu0 0.0
  %898 = vmatpush1.msra.mxu0 0.0
  %899 = vmatprep.subr.mxu0 0.0
  %900 = vmatpush1.msra.mxu0 0.0
  %901 = vmatprep.subr.mxu0 0.0
  %902 = vmatpush1.msra.mxu0 0.0
  %903 = vmatprep.subr.mxu0 0.0
  %904 = vmatpush1.msra.mxu0 0.0
  %905 = vmatprep.subr.mxu0 0.0
  %906 = vmatpush1.msra.mxu0 0.0
  %907 = vmatprep.subr.mxu0 0.0
  %908 = vmatpush1.msra.mxu0 0.0
  %909 = vmatprep.subr.mxu0 0.0
  %910 = vmatpush1.msra.mxu0 0.0
  %911 = vmatprep.subr.mxu0 0.0
  %912 = vmatpush1.msra.mxu0 0.0
  %913 = vmatprep.subr.mxu0 0.0
  %914 = vmatpush1.msra.mxu0 0.0
  %915 = vmatprep.subr.mxu0 0.0
  %916 = vmatpush1.msra.mxu0 0.0
  %917 = vmatprep.subr.mxu0 0.0
  %918 = vmatpush1.msra.mxu0 0.0
  %919 = vmatprep.subr.mxu0 0.0
  %920 = vmatpush1.msra.mxu0 0.0
  %921 = vmatprep.subr.mxu0 0.0
  %922 = vmatpush1.msra.mxu0 0.0
  %923 = vmatprep.subr.mxu0 0.0
  %924 = vmatpush1.msra.mxu0 0.0
  %925 = vmatprep.subr.mxu0 0.0
  %926 = vmatpush1.msra.mxu0 0.0
  %927 = vmatprep.subr.mxu0 0.0
  %928 = vmatpush1.msra.mxu0 0.0
  %929 = vmatprep.subr.mxu0 0.0
  %930 = vmatpush1.msra.mxu0 0.0
  %931 = vmatprep.subr.mxu0 0.0
  %932 = vmatpush1.msra.mxu0 0.0
  %933 = vmatprep.subr.mxu0 0.0
  %934 = vmatpush1.msra.mxu0 0.0
  %935 = vmatprep.subr.mxu0 0.0
  %936 = vmatpush1.msra.mxu0 0.0
  %937 = vmatprep.subr.mxu0 0.0
  %938 = vmatpush1.msra.mxu0 0.0
  %939 = vmatprep.subr.mxu0 0.0
  %940 = vmatpush1.msra.mxu0 0.0
  %941 = vmatprep.subr.mxu0 0.0
  %942 = vmatpush1.msra.mxu0 0.0
  %943 = vmatprep.subr.mxu0 0.0
  %944 = vmatpush1.msra.mxu0 0.0
  %945 = vmatprep.subr.mxu0 0.0
  %946 = vmatpush1.msra.mxu0 0.0
  %947 = vmatprep.mubr.f32.mxu0 0.0
  %948 = vmatmul.mubr.f32.gmra.mrb[0].mxu0 %v881
  %v949 = vpop.f32.mrb[0].mxu0
  %v950 = vadd.f32 %v876, %v949
  %v951 = vpop.f32.mrb[0].mxu0
  %952 = vdwg.mxu0
  %vm953 = vcmask 1041408
  %v954 = vsel %vm953, %v950, 0.0
  %v955 = vrot.slane %v954, 4
  %v956 = vadd.f32 %v954, %v955
  %v957 = vrot.slane %v956, 2
  %v958 = vadd.f32 %v956, %v957
  %v959 = vrot.slane %v958, 1
  %v960 = vadd.f32 %v958, %v959
  %v961 = vrcp.pop 2.0
  %v962 = vmul.f32 %v960, %v961
  %v963 = vsub.f32 %v950, %v962
  %v964 = vmul.f32 %v963, %v963
  %v965 = vsel %vm953, %v964, 0.0
  %v966 = vrot.slane %v965, 4
  %v967 = vadd.f32 %v965, %v966
  %v968 = vrot.slane %v967, 2
  %v969 = vadd.f32 %v967, %v968
  %v970 = vrot.slane %v969, 1
  %v971 = vadd.f32 %v969, %v970
  %v972 = vmul.f32 %v971, %v961
  %v973 = vld [vmem:[%s1 + $0xca] sm:$0x1]
  %v974 = vld [vmem:[%s1 + $0xcb] sm:$0x1]
  %v975 = vadd.f32 %v972, 1e-05
  %v976 = vrsqrt.pop %v975
  %v977 = vmul.f32 %v973, %v976
  %v978 = vmul.f32 %v962, %v977
  %v979 = vsub.f32 %v974, %v978
  %v980 = vlaneseq
  %v981 = vshrl.u32 %v980, 7
  %v982 = vsub.s32 0, %v981
  %v983 = vrot.slane %v977, %v982
  %v984 = vmul.f32 %v950, %v983
  %v985 = vlaneseq
  %v986 = vshrl.u32 %v985, 7
  %v987 = vsub.s32 0, %v986
  %v988 = vrot.slane %v979, %v987
  %v989 = vadd.f32 %v984, %v988
  %v990 = vmax.f32 %v989, 0.0
  %v991 = vld [vmem:[%s1 + $0x48] sm:$0xff]
  %v992 = vld [vmem:[%s1 + $0x50] sm:$0xff]
  %v993 = vld [vmem:[%s1 + $0x58] sm:$0xff]
  %v994 = vld [vmem:[%s1 + $0x60] sm:$0xff]
  %v995 = vld [vmem:[%s1 + $0x68] sm:$0xff]
  %v996 = vld [vmem:[%s1 + $0x70] sm:$0xff]
  %v997 = vld [vmem:[%s1 + $0x78] sm:$0xff]
  %v998 = vld [vmem:[%s1 + $0x80] sm:$0xff]
  %v999 = vld [vmem:[%s1 + $0x88] sm:$0xff]
  %v1000 = vld [vmem:[%s1 + $0x90] sm:$0xff]
  %v1001 = vld [vmem:[%s1 + $0x98] sm:$0xff]
  %v1002 = vld [vmem:[%s1 + $0xa0] sm:$0xff]
  %v1003 = vld [vmem:[%s1 + $0xa8] sm:$0xff]
  %v1004 = vld [vmem:[%s1 + $0xb0] sm:$0xff]
  %v1005 = vld [vmem:[%s1 + $0xb8] sm:$0xff]
  %v1006 = vld [vmem:[%s1 + $0xc0] sm:$0xff]
  %v1007 = vld [vmem:[%s1 + $0xcc] sm:$0x1]
  %v1008 = vlaneseq
  %v1009 = vshrl.u32 %v1008, 7
  %v1010 = vsub.s32 0, %v1009
  %v1011 = vrot.slane %v1007, %v1010
  %1012 = vmatprep.subr.mxu0 0.0
  %1013 = vmatpush1.msra.mxu0 %v991
  %1014 = vmatprep.subr.mxu0 0.0
  %1015 = vmatpush1.msra.mxu0 %v992
  %1016 = vmatprep.subr.mxu0 0.0
  %1017 = vmatpush1.msra.mxu0 %v993
  %1018 = vmatprep.subr.mxu0 0.0
  %1019 = vmatpush1.msra.mxu0 %v994
  %1020 = vmatprep.subr.mxu0 0.0
  %1021 = vmatpush1.msra.mxu0 %v995
  %1022 = vmatprep.subr.mxu0 0.0
  %1023 = vmatpush1.msra.mxu0 %v996
  %1024 = vmatprep.subr.mxu0 0.0
  %1025 = vmatpush1.msra.mxu0 %v997
  %1026 = vmatprep.subr.mxu0 0.0
  %1027 = vmatpush1.msra.mxu0 %v998
  %1028 = vmatprep.subr.mxu0 0.0
  %1029 = vmatpush1.msra.mxu0 %v999
  %1030 = vmatprep.subr.mxu0 0.0
  %1031 = vmatpush1.msra.mxu0 %v1000
  %1032 = vmatprep.subr.mxu0 0.0
  %1033 = vmatpush1.msra.mxu0 %v1001
  %1034 = vmatprep.subr.mxu0 0.0
  %1035 = vmatpush1.msra.mxu0 %v1002
  %1036 = vmatprep.subr.mxu0 0.0
  %1037 = vmatpush1.msra.mxu0 %v1003
  %1038 = vmatprep.subr.mxu0 0.0
  %1039 = vmatpush1.msra.mxu0 %v1004
  %1040 = vmatprep.subr.mxu0 0.0
  %1041 = vmatpush1.msra.mxu0 %v1005
  %1042 = vmatprep.subr.mxu0 0.0
  %1043 = vmatpush1.msra.mxu0 %v1006
  %1044 = vmatprep.subr.mxu0 0.0
  %1045 = vmatpush1.msra.mxu0 0.0
  %1046 = vmatprep.subr.mxu0 0.0
  %1047 = vmatpush1.msra.mxu0 0.0
  %1048 = vmatprep.subr.mxu0 0.0
  %1049 = vmatpush1.msra.mxu0 0.0
  %1050 = vmatprep.subr.mxu0 0.0
  %1051 = vmatpush1.msra.mxu0 0.0
  %1052 = vmatprep.subr.mxu0 0.0
  %1053 = vmatpush1.msra.mxu0 0.0
  %1054 = vmatprep.subr.mxu0 0.0
  %1055 = vmatpush1.msra.mxu0 0.0
  %1056 = vmatprep.subr.mxu0 0.0
  %1057 = vmatpush1.msra.mxu0 0.0
  %1058 = vmatprep.subr.mxu0 0.0
  %1059 = vmatpush1.msra.mxu0 0.0
  %1060 = vmatprep.subr.mxu0 0.0
  %1061 = vmatpush1.msra.mxu0 0.0
  %1062 = vmatprep.subr.mxu0 0.0
  %1063 = vmatpush1.msra.mxu0 0.0
  %1064 = vmatprep.subr.mxu0 0.0
  %1065 = vmatpush1.msra.mxu0 0.0
  %1066 = vmatprep.subr.mxu0 0.0
  %1067 = vmatpush1.msra.mxu0 0.0
  %1068 = vmatprep.subr.mxu0 0.0
  %1069 = vmatpush1.msra.mxu0 0.0
  %1070 = vmatprep.subr.mxu0 0.0
  %1071 = vmatpush1.msra.mxu0 0.0
  %1072 = vmatprep.subr.mxu0 0.0
  %1073 = vmatpush1.msra.mxu0 0.0
  %1074 = vmatprep.subr.mxu0 0.0
  %1075 = vmatpush1.msra.mxu0 0.0
  %1076 = vmatprep.mubr.f32.mxu0 0.0
  %1077 = vmatmul.mubr.f32.gmra.mrb[0].mxu0 %v990
  %v1078 = vpop.f32.mrb[0].mxu0
  %v1079 = vadd.f32 %v1011, %v1078
  %v1080 = vpop.f32.mrb[0].mxu0
  %1081 = vdwg.mxu0
  %v1082 = vadd.f32 %v990, %v1079
  %1083 = vst [vmem:[%s2] sm:$0x3] %v1082
  %vm1085 = vcmask 254976
  %1086 = vst.msk [vmem:[%s2] sm:$0x3] %vm1085, %v880
  // Predicated region
  $region10: #{image_classifier_forward.1} parent=0 // pred_check
    _
  $region11: #{image_classifier_forward.1} parent=0 // pred_check_branch
    %1088 = sbr.rel (0) target = $region13
  $region12: #{image_classifier_forward.1} parent=0 // pred_region
    _
  $region13: #{image_classifier_forward.1} parent=0 // pred_fallthru
    _
  // Predicated region
  $region14: #{image_classifier_forward.1} parent=0 // pred_check
    _
  $region15: #{image_classifier_forward.1} parent=0 // pred_check_branch
    %1090 = sbr.rel (0) target = $region17
  $region16: #{image_classifier_forward.1} parent=0 // pred_region
    _
  $region17: #{image_classifier_forward.1} parent=0 // pred_fallthru
    _

</llo_original>
